<compile_context>
chip_gen: v7x
topology: tpu7x:2x2x1
jax: 0.10.0
libtpu: 0.0.40
codegen_flags: <defaults>
</compile_context>

<pallas_src>
import functools

import jax
import jax.numpy as jnp
from jax.experimental import pallas as pl
from jax.experimental.pallas import tpu as pltpu

LANE = 128
_MIN_SPLIT = 512                       # batches >= this get >= 2 grid steps (v7x: 2 TCs)
_VMEM_LIMIT_BYTES = 32 * 1024 * 1024   # >= default scoped limit on every generation
_PARAM_VMEM_BUDGET = 24 * 1024 * 1024  # conservative vs v7x 64 MiB physical VMEM


def _round_up(n, m):
    return ((n + m - 1) // m) * m


# ----------------------------- math helpers (in-kernel) -----------------------------

def _gelu_exact(x):
    # torch.nn.GELU() default (approximate='none'): 0.5*x*(1+erf(x/sqrt(2))).
    # erf via Abramowitz & Stegun 7.1.26 (|err| < 1.5e-7), branchless:
    #   P = poly(t)*exp(-u^2), u = |x|/sqrt(2), t = 1/(1+p*u)
    #   GELU = x - 0.5*x*P   (x >= 0)
    #        =     0.5*x*P   (x <  0)
    a1, a2, a3, a4, a5 = 0.254829592, -0.284496736, 1.421413741, -1.453152027, 1.061405429
    p = 0.3275911
    u = jnp.abs(x) * 0.7071067811865476
    t = pl.reciprocal(1.0 + p * u, approx=True)          # EUP
    poly = ((((a5 * t + a4) * t + a3) * t + a2) * t + a1) * t
    g = (0.5 * x) * poly * jnp.exp(-u * u)                # EUP exp
    return jnp.where(x >= 0, x - g, g)


# ----------------------------- fused kernel -----------------------------

def _net_kernel(real_dims, x_ref, *refs):
    """Whole-network body.

    refs = (w_1, slab_1, ..., w_L, slab_L, w_out, b_out, o_ref)
    slab_l rows: 0 = bias, 1 = gamma, 2 = beta (rows 3..7 / pad lanes are zero).
    real_dims[l] = un-padded width of hidden layer l (for LN statistics).
    """
    o_ref = refs[-1]
    prefs = refs[:-1]
    n_hidden = len(real_dims)

    h = x_ref[...].astype(jnp.float32)
    for l in range(n_hidden):
        w = prefs[2 * l][...]
        slab = prefs[2 * l + 1]
        b = slab[0:1, :]
        gamma = slab[1:2, :]
        beta = slab[2:3, :]

        # Linear (MXU), f32 accumulation. Padded output lanes are exactly 0.
        y = jnp.dot(h, w, preferred_element_type=jnp.float32) + b

        # One-pass LayerNorm over the REAL feature count (eps = 1e-5, PyTorch).
        # (E[y^2]-mean^2 with a >=0 guard; fine at these weight/activation scales.)
        inv_d = 1.0 / float(real_dims[l])
        mean = jnp.sum(y, axis=-1, keepdims=True) * inv_d
        ex2 = jnp.sum(y * y, axis=-1, keepdims=True) * inv_d
        var = jnp.maximum(ex2 - mean * mean, 0.0)
        y = (y - mean) * jax.lax.rsqrt(var + 1e-5)
        # gamma is 0 on padded lanes -> padded lanes return to exactly 0.
        y = y * gamma + beta

        h = _gelu_exact(y)

    w_out = prefs[-2][...]
    b_out = prefs[-1][...]
    o_ref[...] = (jnp.dot(h, w_out, preferred_element_type=jnp.float32)
                  + b_out).astype(o_ref.dtype)


# ----------------------------- parameter init (deterministic) -----------------------------

def init_params(key, input_dim, hidden_dims, output_dim, out_coef=0.01):
    """PyTorch defaults: Linear ~ U(-1/sqrt(fan_in), 1/sqrt(fan_in));
    LayerNorm gamma=1, beta=0; output Linear scaled by out_coef."""
    params = {"body": []}
    last = input_dim
    for dim in hidden_dims:
        key, kw, kb = jax.random.split(key, 3)
        bound = 1.0 / (last ** 0.5)
        w = jax.random.uniform(kw, (last, dim), jnp.float32, -bound, bound)
        b = jax.random.uniform(kb, (1, dim), jnp.float32, -bound, bound)
        gamma = jnp.ones((1, dim), jnp.float32)
        beta = jnp.zeros((1, dim), jnp.float32)
        params["body"].append((w, b, gamma, beta))
        last = dim
    key, kw, kb = jax.random.split(key, 3)
    bound = 1.0 / (last ** 0.5)
    w_out = jax.random.uniform(kw, (last, output_dim), jnp.float32, -bound, bound) * out_coef
    b_out = jax.random.uniform(kb, (1, output_dim), jnp.float32, -bound, bound) * out_coef
    params["out"] = (w_out, b_out)
    return params


def prepare_params(params):
    """Pad hidden feature dims to 128 lanes, stack (b, gamma, beta) into one
    sublane-aligned (8, Dpad) slab per hidden layer, keep the output head at
    its real width. Done once, outside jit."""
    def pad2(a, rows, cols):
        r, c = a.shape
        return jnp.pad(a, ((0, rows - r), (0, cols - c)))

    flat = []
    real_dims = []
    prev_pad = None
    for (w, b, gamma, beta) in params["body"]:
        din, dout = w.shape
        din_p = din if prev_pad is None else prev_pad
        dout_p = _round_up(dout, LANE)
        flat.append(pad2(w, din_p, dout_p))
        slab = jnp.zeros((8, dout_p), jnp.float32)
        slab = slab.at[0, :dout].set(b[0])
        slab = slab.at[1, :dout].set(gamma[0])
        slab = slab.at[2, :dout].set(beta[0])
        flat.append(slab)
        real_dims.append(dout)
        prev_pad = dout_p

    w_out, b_out = params["out"]
    din, dout = w_out.shape
    din_p = din if prev_pad is None else prev_pad
    # Output head is NOT lane padded: the pallas output has the real out_dim so
    # HBM writeback is 1x and no wrapper slice pass is needed.
    flat.append(pad2(w_out, din_p, dout))
    flat.append(b_out)

    # Guard the "all params resident in VMEM" design (double-buffered blocks).
    param_bytes = 2 * sum(int(a.size) * a.dtype.itemsize for a in flat)
    if param_bytes > _PARAM_VMEM_BUDGET:
        # TODO(synk): switch per-layer weights to a K/N-tiled pltpu.emit_pipeline
        # once hidden widths outgrow the all-resident VMEM budget (v7x: 64 MiB).
        raise ValueError(
            f"parameters need ~{param_bytes} bytes of VMEM (> {_PARAM_VMEM_BUDGET}); "
            "weight tiling fallback not implemented")

    return {"flat": tuple(flat), "real_dims": tuple(real_dims)}


# ----------------------------- forward (single fused pallas_call) -----------------------------

@functools.partial(jax.jit, static_argnames=("real_dims", "bm", "io_dtype"))
def _net_forward_impl(x, *flat, real_dims, bm, io_dtype):
    B, din = x.shape
    out_dim = flat[-1].shape[-1]
    out_dtype = jnp.float32 if io_dtype is None else io_dtype

    if io_dtype is not None:
        x = x.astype(io_dtype)   # bf16 HBM streaming; compute stays f32 in-kernel

    # Batch tile: big tiles amortize the per-step pipeline overhead; make sure
    # large batches get >= 2 grid steps so both v7x TensorCores have work.
    bm = max(8, _round_up(bm, 8))
    if B <= bm:
        bm_eff = _round_up((B + 1) // 2, 8) if B >= _MIN_SPLIT else B
    else:
        bm_eff = bm
    grid = (int(pl.cdiv(B, bm_eff)),)   # trailing partial block -> masked stores

    in_specs = [pl.BlockSpec((bm_eff, din), lambda i: (i, 0))]
    for arr in flat:
        # All params are tiny; keep each fully resident in VMEM (block = full array).
        in_specs.append(pl.BlockSpec(arr.shape, lambda i: (0, 0)))

    out = pl.pallas_call(
        functools.partial(_net_kernel, real_dims),
        out_shape=jax.ShapeDtypeStruct((B, out_dim), out_dtype),
        grid_spec=pltpu.PrefetchScalarGridSpec(
            num_scalar_prefetch=0,
            grid=grid,
            in_specs=in_specs,
            out_specs=pl.BlockSpec((bm_eff, out_dim), lambda i: (i, 0)),
        ),
        compiler_params=pltpu.CompilerParams(
            dimension_semantics=("parallel",),
            vmem_limit_bytes=_VMEM_LIMIT_BYTES,
        ),
    )(x, *flat)
    return out


def net_forward(prepared, x, *, bm=1024, io_dtype=None):
    return _net_forward_impl(
        x, *prepared["flat"],
        real_dims=prepared["real_dims"],
        bm=bm,
        io_dtype=io_dtype,
    )


# ----------------------------- reference (plain JAX, un-padded params) -----------------------------

def net_forward_ref(params, x):
    h = x
    for (w, b, gamma, beta) in params["body"]:
        y = h @ w + b
        mean = jnp.mean(y, axis=-1, keepdims=True)
        var = jnp.mean((y - mean) ** 2, axis=-1, keepdims=True)
        y = (y - mean) * jax.lax.rsqrt(var + 1e-5) * gamma + beta
        h = jax.nn.gelu(y, approximate=False)
    w_out, b_out = params["out"]
    return h @ w_out + b_out


if __name__ == "__main__":
    input_dim, hidden_dims, output_dim = 32, (64, 64), 16

    key = jax.random.PRNGKey(0)
    kp, kx1, kx2 = jax.random.split(key, 3)
    params = init_params(kp, input_dim, hidden_dims, output_dim)
    prepared = prepare_params(params)

    # 1) Small batch: single full-batch tile, single grid step.
    x_small = jax.random.normal(kx1, (8, input_dim), jnp.float32)
    out_small = net_forward(prepared, x_small)
    jax.block_until_ready(out_small)
    ref_small = net_forward_ref(params, x_small)
    assert out_small.shape == (8, output_dim)
    err = float(jnp.max(jnp.abs(out_small - ref_small)))
    assert jnp.allclose(out_small, ref_small, atol=2e-4, rtol=2e-4), f"small-batch mismatch (max abs err={err})"

    # 2) Larger batch: exercises the multi-step "parallel" grid (>=2 steps for v7x).
    x_big = jax.random.normal(kx2, (1024, input_dim), jnp.float32)
    out_big = net_forward(prepared, x_big)
    jax.block_until_ready(out_big)
    ref_big = net_forward_ref(params, x_big)
    assert out_big.shape == (1024, output_dim)
    err = float(jnp.max(jnp.abs(out_big - ref_big)))
    assert jnp.allclose(out_big, ref_big, atol=5e-4, rtol=5e-4), f"big-batch mismatch (max abs err={err})"

    # 3) Optional bf16 HBM streaming path (compute stays f32 in-kernel).
    out_bf16 = net_forward(prepared, x_big, io_dtype=jnp.bfloat16)
    jax.block_until_ready(out_bf16)
    assert out_bf16.dtype == jnp.bfloat16 and out_bf16.shape == (1024, output_dim)
    err = float(jnp.max(jnp.abs(out_bf16.astype(jnp.float32) - ref_big)))
    assert jnp.allclose(out_bf16.astype(jnp.float32), ref_big, atol=2e-3, rtol=5e-2), \
        f"bf16 mismatch (max abs err={err})"

    print("KERNEL_OK")
</pallas_src>

<mosaic_0001>
module attributes {stable_mosaic.version = 11 : i64} {
  func.func @_net_kernel(%arg0: i32, %arg1: memref<8x32xf32, #tpu.memory_space<vmem>>, %arg2: memref<32x128xf32, #tpu.memory_space<vmem>>, %arg3: memref<8x128xf32, #tpu.memory_space<vmem>>, %arg4: memref<128x128xf32, #tpu.memory_space<vmem>>, %arg5: memref<8x128xf32, #tpu.memory_space<vmem>>, %arg6: memref<128x16xf32, #tpu.memory_space<vmem>>, %arg7: memref<1x16xf32, #tpu.memory_space<vmem>>, %arg8: memref<8x16xf32, #tpu.memory_space<vmem>>) attributes {dimension_semantics = [#tpu.dimension_semantics<parallel>], iteration_bounds = array<i64: 1>, scalar_prefetch = 0 : i64, scratch_operands = 0 : i64, tpu.core_type = #tpu.core_type<tc>, window_params = [{transform_indices = @transform_0, window_bounds = array<i64: 8, 32>}, {pipeline_mode = #tpu.pipeline_mode<synchronous>, transform_indices = @transform_1, window_bounds = array<i64: 32, 128>}, {pipeline_mode = #tpu.pipeline_mode<synchronous>, transform_indices = @transform_2, window_bounds = array<i64: 8, 128>}, {pipeline_mode = #tpu.pipeline_mode<synchronous>, transform_indices = @transform_3, window_bounds = array<i64: 128, 128>}, {pipeline_mode = #tpu.pipeline_mode<synchronous>, transform_indices = @transform_4, window_bounds = array<i64: 8, 128>}, {pipeline_mode = #tpu.pipeline_mode<synchronous>, transform_indices = @transform_5, window_bounds = array<i64: 128, 16>}, {pipeline_mode = #tpu.pipeline_mode<synchronous>, transform_indices = @transform_6, window_bounds = array<i64: 1, 16>}, {transform_indices = @transform_7, window_bounds = array<i64: 8, 16>}]} {
    %c0 = arith.constant 0 : index
    %c0_0 = arith.constant 0 : index
    %0 = vector.load %arg1[%c0, %c0_0] : memref<8x32xf32, #tpu.memory_space<vmem>>, vector<8x32xf32>
    %c0_1 = arith.constant 0 : index
    %c0_2 = arith.constant 0 : index
    %1 = vector.load %arg2[%c0_1, %c0_2] : memref<32x128xf32, #tpu.memory_space<vmem>>, vector<32x128xf32>
    %c0_3 = arith.constant 0 : index
    %c0_4 = arith.constant 0 : index
    %2 = vector.load %arg3[%c0_3, %c0_4] : memref<8x128xf32, #tpu.memory_space<vmem>>, vector<1x128xf32>
    %c1 = arith.constant 1 : index
    %c0_5 = arith.constant 0 : index
    %3 = vector.load %arg3[%c1, %c0_5] : memref<8x128xf32, #tpu.memory_space<vmem>>, vector<1x128xf32>
    %c2 = arith.constant 2 : index
    %c0_6 = arith.constant 0 : index
    %4 = vector.load %arg3[%c2, %c0_6] : memref<8x128xf32, #tpu.memory_space<vmem>>, vector<1x128xf32>
    %cst = arith.constant dense<0.000000e+00> : vector<8x128xf32>
    %5 = tpu.matmul %0, %1, %cst {dimension_numbers = #tpu.dot_dimension_numbers<[1], [0], [0], [1], [0, 0, 1, 1], [], []>} : vector<8x32xf32>, vector<32x128xf32>, vector<8x128xf32> -> vector<8x128xf32>
    %6 = vector.broadcast %2 : vector<1x128xf32> to vector<8x128xf32>
    %7 = arith.addf %5, %6 : vector<8x128xf32>
    %cst_7 = arith.constant dense<0.000000e+00> : vector<8xf32>
    %8 = vector.multi_reduction <add>, %7, %cst_7 [1] : vector<8x128xf32> to vector<8xf32>
    %9 = vector.shape_cast %8 : vector<8xf32> to vector<8x1xf32>
    %cst_8 = arith.constant 1.562500e-02 : f32
    %10 = vector.broadcast %cst_8 : f32 to vector<8x1xf32>
    %11 = arith.mulf %9, %10 : vector<8x1xf32>
    %12 = arith.mulf %7, %7 : vector<8x128xf32>
    %cst_9 = arith.constant dense<0.000000e+00> : vector<8xf32>
    %13 = vector.multi_reduction <add>, %12, %cst_9 [1] : vector<8x128xf32> to vector<8xf32>
    %14 = vector.shape_cast %13 : vector<8xf32> to vector<8x1xf32>
    %cst_10 = arith.constant 1.562500e-02 : f32
    %15 = vector.broadcast %cst_10 : f32 to vector<8x1xf32>
    %16 = arith.mulf %14, %15 : vector<8x1xf32>
    %17 = arith.mulf %11, %11 : vector<8x1xf32>
    %18 = arith.subf %16, %17 : vector<8x1xf32>
    %cst_11 = arith.constant 0.000000e+00 : f32
    %19 = vector.broadcast %cst_11 : f32 to vector<8x1xf32>
    %20 = arith.maximumf %18, %19 : vector<8x1xf32>
    %21 = vector.broadcast %11 : vector<8x1xf32> to vector<8x128xf32>
    %22 = arith.subf %7, %21 : vector<8x128xf32>
    %cst_12 = arith.constant 9.99999974E-6 : f32
    %23 = vector.broadcast %cst_12 : f32 to vector<8x1xf32>
    %24 = arith.addf %20, %23 : vector<8x1xf32>
    %25 = math.rsqrt %24 : vector<8x1xf32>
    %26 = vector.broadcast %25 : vector<8x1xf32> to vector<8x128xf32>
    %27 = arith.mulf %22, %26 : vector<8x128xf32>
    %28 = vector.broadcast %3 : vector<1x128xf32> to vector<8x128xf32>
    %29 = arith.mulf %27, %28 : vector<8x128xf32>
    %30 = vector.broadcast %4 : vector<1x128xf32> to vector<8x128xf32>
    %31 = arith.addf %29, %30 : vector<8x128xf32>
    %32 = math.absf %31 : vector<8x128xf32>
    %cst_13 = arith.constant 0.707106769 : f32
    %33 = vector.broadcast %cst_13 : f32 to vector<8x128xf32>
    %34 = arith.mulf %32, %33 : vector<8x128xf32>
    %cst_14 = arith.constant 0.327591091 : f32
    %35 = vector.broadcast %cst_14 : f32 to vector<8x128xf32>
    %36 = arith.mulf %35, %34 : vector<8x128xf32>
    %cst_15 = arith.constant 1.000000e+00 : f32
    %37 = vector.broadcast %cst_15 : f32 to vector<8x128xf32>
    %38 = arith.addf %37, %36 : vector<8x128xf32>
    %39 = tpu.reciprocal %38 {approx = true} : vector<8x128xf32> -> vector<8x128xf32>
    %cst_16 = arith.constant 1.06140542 : f32
    %40 = vector.broadcast %cst_16 : f32 to vector<8x128xf32>
    %41 = arith.mulf %40, %39 : vector<8x128xf32>
    %cst_17 = arith.constant -1.45315206 : f32
    %42 = vector.broadcast %cst_17 : f32 to vector<8x128xf32>
    %43 = arith.addf %41, %42 : vector<8x128xf32>
    %44 = arith.mulf %43, %39 : vector<8x128xf32>
    %cst_18 = arith.constant 1.42141378 : f32
    %45 = vector.broadcast %cst_18 : f32 to vector<8x128xf32>
    %46 = arith.addf %44, %45 : vector<8x128xf32>
    %47 = arith.mulf %46, %39 : vector<8x128xf32>
    %cst_19 = arith.constant -0.284496725 : f32
    %48 = vector.broadcast %cst_19 : f32 to vector<8x128xf32>
    %49 = arith.addf %47, %48 : vector<8x128xf32>
    %50 = arith.mulf %49, %39 : vector<8x128xf32>
    %cst_20 = arith.constant 0.254829586 : f32
    %51 = vector.broadcast %cst_20 : f32 to vector<8x128xf32>
    %52 = arith.addf %50, %51 : vector<8x128xf32>
    %53 = arith.mulf %52, %39 : vector<8x128xf32>
    %cst_21 = arith.constant 5.000000e-01 : f32
    %54 = vector.broadcast %cst_21 : f32 to vector<8x128xf32>
    %55 = arith.mulf %54, %31 : vector<8x128xf32>
    %56 = arith.mulf %55, %53 : vector<8x128xf32>
    %cst_22 = arith.constant 0.000000e+00 : f32
    %57 = vector.broadcast %cst_22 : f32 to vector<8x128xf32>
    %58 = arith.subf %57, %34 : vector<8x128xf32>
    %59 = arith.mulf %58, %34 : vector<8x128xf32>
    %60 = math.exp %59 : vector<8x128xf32>
    %61 = arith.mulf %56, %60 : vector<8x128xf32>
    %cst_23 = arith.constant 0.000000e+00 : f32
    %62 = vector.broadcast %cst_23 : f32 to vector<8x128xf32>
    %63 = arith.cmpf oge, %31, %62 : vector<8x128xf32>
    %64 = arith.subf %31, %61 : vector<8x128xf32>
    %65 = arith.select %63, %64, %61 : vector<8x128xi1>, vector<8x128xf32>
    %c0_24 = arith.constant 0 : index
    %c0_25 = arith.constant 0 : index
    %66 = vector.load %arg4[%c0_24, %c0_25] : memref<128x128xf32, #tpu.memory_space<vmem>>, vector<128x128xf32>
    %c0_26 = arith.constant 0 : index
    %c0_27 = arith.constant 0 : index
    %67 = vector.load %arg5[%c0_26, %c0_27] : memref<8x128xf32, #tpu.memory_space<vmem>>, vector<1x128xf32>
    %c1_28 = arith.constant 1 : index
    %c0_29 = arith.constant 0 : index
    %68 = vector.load %arg5[%c1_28, %c0_29] : memref<8x128xf32, #tpu.memory_space<vmem>>, vector<1x128xf32>
    %c2_30 = arith.constant 2 : index
    %c0_31 = arith.constant 0 : index
    %69 = vector.load %arg5[%c2_30, %c0_31] : memref<8x128xf32, #tpu.memory_space<vmem>>, vector<1x128xf32>
    %cst_32 = arith.constant dense<0.000000e+00> : vector<8x128xf32>
    %70 = tpu.matmul %65, %66, %cst_32 {dimension_numbers = #tpu.dot_dimension_numbers<[1], [0], [0], [1], [0, 0, 1, 1], [], []>} : vector<8x128xf32>, vector<128x128xf32>, vector<8x128xf32> -> vector<8x128xf32>
    %71 = vector.broadcast %67 : vector<1x128xf32> to vector<8x128xf32>
    %72 = arith.addf %70, %71 : vector<8x128xf32>
    %cst_33 = arith.constant dense<0.000000e+00> : vector<8xf32>
    %73 = vector.multi_reduction <add>, %72, %cst_33 [1] : vector<8x128xf32> to vector<8xf32>
    %74 = vector.shape_cast %73 : vector<8xf32> to vector<8x1xf32>
    %cst_34 = arith.constant 1.562500e-02 : f32
    %75 = vector.broadcast %cst_34 : f32 to vector<8x1xf32>
    %76 = arith.mulf %74, %75 : vector<8x1xf32>
    %77 = arith.mulf %72, %72 : vector<8x128xf32>
    %cst_35 = arith.constant dense<0.000000e+00> : vector<8xf32>
    %78 = vector.multi_reduction <add>, %77, %cst_35 [1] : vector<8x128xf32> to vector<8xf32>
    %79 = vector.shape_cast %78 : vector<8xf32> to vector<8x1xf32>
    %cst_36 = arith.constant 1.562500e-02 : f32
    %80 = vector.broadcast %cst_36 : f32 to vector<8x1xf32>
    %81 = arith.mulf %79, %80 : vector<8x1xf32>
    %82 = arith.mulf %76, %76 : vector<8x1xf32>
    %83 = arith.subf %81, %82 : vector<8x1xf32>
    %cst_37 = arith.constant 0.000000e+00 : f32
    %84 = vector.broadcast %cst_37 : f32 to vector<8x1xf32>
    %85 = arith.maximumf %83, %84 : vector<8x1xf32>
    %86 = vector.broadcast %76 : vector<8x1xf32> to vector<8x128xf32>
    %87 = arith.subf %72, %86 : vector<8x128xf32>
    %cst_38 = arith.constant 9.99999974E-6 : f32
    %88 = vector.broadcast %cst_38 : f32 to vector<8x1xf32>
    %89 = arith.addf %85, %88 : vector<8x1xf32>
    %90 = math.rsqrt %89 : vector<8x1xf32>
    %91 = vector.broadcast %90 : vector<8x1xf32> to vector<8x128xf32>
    %92 = arith.mulf %87, %91 : vector<8x128xf32>
    %93 = vector.broadcast %68 : vector<1x128xf32> to vector<8x128xf32>
    %94 = arith.mulf %92, %93 : vector<8x128xf32>
    %95 = vector.broadcast %69 : vector<1x128xf32> to vector<8x128xf32>
    %96 = arith.addf %94, %95 : vector<8x128xf32>
    %97 = math.absf %96 : vector<8x128xf32>
    %cst_39 = arith.constant 0.707106769 : f32
    %98 = vector.broadcast %cst_39 : f32 to vector<8x128xf32>
    %99 = arith.mulf %97, %98 : vector<8x128xf32>
    %cst_40 = arith.constant 0.327591091 : f32
    %100 = vector.broadcast %cst_40 : f32 to vector<8x128xf32>
    %101 = arith.mulf %100, %99 : vector<8x128xf32>
    %cst_41 = arith.constant 1.000000e+00 : f32
    %102 = vector.broadcast %cst_41 : f32 to vector<8x128xf32>
    %103 = arith.addf %102, %101 : vector<8x128xf32>
    %104 = tpu.reciprocal %103 {approx = true} : vector<8x128xf32> -> vector<8x128xf32>
    %cst_42 = arith.constant 1.06140542 : f32
    %105 = vector.broadcast %cst_42 : f32 to vector<8x128xf32>
    %106 = arith.mulf %105, %104 : vector<8x128xf32>
    %cst_43 = arith.constant -1.45315206 : f32
    %107 = vector.broadcast %cst_43 : f32 to vector<8x128xf32>
    %108 = arith.addf %106, %107 : vector<8x128xf32>
    %109 = arith.mulf %108, %104 : vector<8x128xf32>
    %cst_44 = arith.constant 1.42141378 : f32
    %110 = vector.broadcast %cst_44 : f32 to vector<8x128xf32>
    %111 = arith.addf %109, %110 : vector<8x128xf32>
    %112 = arith.mulf %111, %104 : vector<8x128xf32>
    %cst_45 = arith.constant -0.284496725 : f32
    %113 = vector.broadcast %cst_45 : f32 to vector<8x128xf32>
    %114 = arith.addf %112, %113 : vector<8x128xf32>
    %115 = arith.mulf %114, %104 : vector<8x128xf32>
    %cst_46 = arith.constant 0.254829586 : f32
    %116 = vector.broadcast %cst_46 : f32 to vector<8x128xf32>
    %117 = arith.addf %115, %116 : vector<8x128xf32>
    %118 = arith.mulf %117, %104 : vector<8x128xf32>
    %cst_47 = arith.constant 5.000000e-01 : f32
    %119 = vector.broadcast %cst_47 : f32 to vector<8x128xf32>
    %120 = arith.mulf %119, %96 : vector<8x128xf32>
    %121 = arith.mulf %120, %118 : vector<8x128xf32>
    %cst_48 = arith.constant 0.000000e+00 : f32
    %122 = vector.broadcast %cst_48 : f32 to vector<8x128xf32>
    %123 = arith.subf %122, %99 : vector<8x128xf32>
    %124 = arith.mulf %123, %99 : vector<8x128xf32>
    %125 = math.exp %124 : vector<8x128xf32>
    %126 = arith.mulf %121, %125 : vector<8x128xf32>
    %cst_49 = arith.constant 0.000000e+00 : f32
    %127 = vector.broadcast %cst_49 : f32 to vector<8x128xf32>
    %128 = arith.cmpf oge, %96, %127 : vector<8x128xf32>
    %129 = arith.subf %96, %126 : vector<8x128xf32>
    %130 = arith.select %128, %129, %126 : vector<8x128xi1>, vector<8x128xf32>
    %c0_50 = arith.constant 0 : index
    %c0_51 = arith.constant 0 : index
    %131 = vector.load %arg6[%c0_50, %c0_51] : memref<128x16xf32, #tpu.memory_space<vmem>>, vector<128x16xf32>
    %c0_52 = arith.constant 0 : index
    %c0_53 = arith.constant 0 : index
    %132 = vector.load %arg7[%c0_52, %c0_53] : memref<1x16xf32, #tpu.memory_space<vmem>>, vector<1x16xf32>
    %cst_54 = arith.constant dense<0.000000e+00> : vector<8x16xf32>
    %133 = tpu.matmul %130, %131, %cst_54 {dimension_numbers = #tpu.dot_dimension_numbers<[1], [0], [0], [1], [0, 0, 1, 1], [], []>} : vector<8x128xf32>, vector<128x16xf32>, vector<8x16xf32> -> vector<8x16xf32>
    %134 = vector.broadcast %132 : vector<1x16xf32> to vector<8x16xf32>
    %135 = arith.addf %133, %134 : vector<8x16xf32>
    %c0_55 = arith.constant 0 : index
    %c0_56 = arith.constant 0 : index
    %136 = vector.load %arg8[%c0_55, %c0_56] : memref<8x16xf32, #tpu.memory_space<vmem>>, vector<8x16xf32>
    tpu.vector_store %arg8[%c0_55, %c0_56], %135 {strides = array<i32>} : memref<8x16xf32, #tpu.memory_space<vmem>>, vector<8x16xf32>,
    return
  }
  func.func @transform_0(%arg0: i32) -> (i32, i32) {
    %c0_i32 = arith.constant 0 : i32
    %c0_i32_0 = arith.constant 0 : i32
    return %arg0, %c0_i32 : i32, i32
  }
  func.func @transform_1(%arg0: i32) -> (i32, i32) {
    %c0_i32 = arith.constant 0 : i32
    %c0_i32_0 = arith.constant 0 : i32
    %c0_i32_1 = arith.constant 0 : i32
    return %c0_i32, %c0_i32_0 : i32, i32
  }
  func.func @transform_2(%arg0: i32) -> (i32, i32) {
    %c0_i32 = arith.constant 0 : i32
    %c0_i32_0 = arith.constant 0 : i32
    %c0_i32_1 = arith.constant 0 : i32
    return %c0_i32, %c0_i32_0 : i32, i32
  }
  func.func @transform_3(%arg0: i32) -> (i32, i32) {
    %c0_i32 = arith.constant 0 : i32
    %c0_i32_0 = arith.constant 0 : i32
    %c0_i32_1 = arith.constant 0 : i32
    return %c0_i32, %c0_i32_0 : i32, i32
  }
  func.func @transform_4(%arg0: i32) -> (i32, i32) {
    %c0_i32 = arith.constant 0 : i32
    %c0_i32_0 = arith.constant 0 : i32
    %c0_i32_1 = arith.constant 0 : i32
    return %c0_i32, %c0_i32_0 : i32, i32
  }
  func.func @transform_5(%arg0: i32) -> (i32, i32) {
    %c0_i32 = arith.constant 0 : i32
    %c0_i32_0 = arith.constant 0 : i32
    %c0_i32_1 = arith.constant 0 : i32
    return %c0_i32, %c0_i32_0 : i32, i32
  }
  func.func @transform_6(%arg0: i32) -> (i32, i32) {
    %c0_i32 = arith.constant 0 : i32
    %c0_i32_0 = arith.constant 0 : i32
    %c0_i32_1 = arith.constant 0 : i32
    return %c0_i32, %c0_i32_0 : i32, i32
  }
  func.func @transform_7(%arg0: i32) -> (i32, i32) {
    %c0_i32 = arith.constant 0 : i32
    %c0_i32_0 = arith.constant 0 : i32
    return %arg0, %c0_i32 : i32, i32
  }
}

</mosaic_0001>

<llo_original>
// kernel: _net_forward_impl.1
$region0: #{_net_forward_impl.1}
  #allocation0 [shape = 'u32[]', space=smem, size = 0x4, offset = 0x4, fixed_abs, tag = 'smem constant byte address 0x4 - core index']
  #allocation1 [shape = 'u32[144,128]{1,0:T(1,128)}', space=vmem, size = 0x12000, scoped, tag = 'internal scratch']
  %s0 = inlined_call_operand.vmem [shape: f32[8,32], index: 0, kind: input, shape index: {}]
  %s1 = inlined_call_operand.hbm [shape: f32[32,128], index: 1, kind: input, shape index: {}]
  %s2 = inlined_call_operand.vmem [shape: f32[8,128], index: 2, kind: input, shape index: {}]
  %s3 = inlined_call_operand.vmem [shape: f32[128,128], index: 3, kind: input, shape index: {}]
  %s4 = inlined_call_operand.hbm [shape: f32[8,128], index: 4, kind: input, shape index: {}]
  %s5 = inlined_call_operand.vmem [shape: f32[128,16], index: 5, kind: input, shape index: {}]
  %s6 = inlined_call_operand.vmem [shape: f32[1,16], index: 6, kind: input, shape index: {}]
  %s7 = inlined_call_operand.hbm [shape: f32[8,16], index: 7, kind: output, shape index: {}]
  %s8 = sld [smem:[#allocation0]]
  $region46: #{_net_forward_impl.1} parent=0
    _
  %s10 = ssub.s32 1, %s8
  %s11 = scalar_select 0, %s10, %s8
  $region1: #{_net_forward_impl.1} parent=0
    #allocation2 [shape = 'u8[16384]{0}', space=vmem, size = 0x4000, scoped, tag = 'input window, operand 1, single buffered']
    #allocation3 [shape = 's32[1]{0}', space=sflag, size = 0x4, scoped, tag = 'scoped memory for _net_forward_impl.1']
    #allocation4 [shape = 's32[1]{0}', space=sflag, size = 0x4, scoped, tag = 'scoped memory for _net_forward_impl.1']
    #allocation5 [shape = 'u8[4096]{0}', space=vmem, size = 0x1000, scoped, tag = 'input window, operand 4, single buffered']
    #allocation6 [shape = 's32[1]{0}', space=sflag, size = 0x4, scoped, tag = 'scoped memory for _net_forward_impl.1']
    #allocation7 [shape = 'u8[4096]{0}', space=vmem, size = 0x1000, scoped, tag = 'output window, operand 0, single buffered']
    %12 = vsyncpa [#allocation3], 0
    %13 = vsyncpa [#allocation6], 0
    %14 = vsyncpa [#allocation4], 0
    // Predicated region
    $region2: #{_net_forward_impl.1} parent=1 // pred_check
      _
    $region3: #{_net_forward_impl.1} parent=1 // pred_check_branch
      %16 = sbr.rel (0) target = $region5
    $region4: #{_net_forward_impl.1} parent=1 // pred_region
      _
    $region5: #{_net_forward_impl.1} parent=1 // pred_fallthru
      _
    // Predicated region
    $region6: #{_net_forward_impl.1} parent=1 // pred_check
      _
    $region7: #{_net_forward_impl.1} parent=1 // pred_check_branch
      %18 = sbr.rel (0) target = $region9
    $region8: #{_net_forward_impl.1} parent=1 // pred_region
      %s20 = ssub.s32 512, 512
      %21 = vsyncadd [#allocation3], %s20
      %s22 = sshll.u32 [#allocation2], 4
      %s23 = int_to_ptr.vmem [resolvable:$true] %s22
      %28 = dma.hbm_to_vmem [thread:$0]  %s1, 512, %s23, [#allocation3], 128, 128, 8
    $region9: #{_net_forward_impl.1} parent=1 // pred_fallthru
      _
    // Predicated region
    $region10: #{_net_forward_impl.1} parent=1 // pred_check
      _
    $region11: #{_net_forward_impl.1} parent=1 // pred_check_branch
      %30 = sbr.rel (0) target = $region13
    $region12: #{_net_forward_impl.1} parent=1 // pred_region
      _
    $region13: #{_net_forward_impl.1} parent=1 // pred_fallthru
      _
    // Predicated region
    $region14: #{_net_forward_impl.1} parent=1 // pred_check
      _
    $region15: #{_net_forward_impl.1} parent=1 // pred_check_branch
      %32 = sbr.rel (0) target = $region17
    $region16: #{_net_forward_impl.1} parent=1 // pred_region
      _
    $region17: #{_net_forward_impl.1} parent=1 // pred_fallthru
      _
    // Predicated region
    $region18: #{_net_forward_impl.1} parent=1 // pred_check
      _
    $region19: #{_net_forward_impl.1} parent=1 // pred_check_branch
      %34 = sbr.rel (0) target = $region21
    $region20: #{_net_forward_impl.1} parent=1 // pred_region
      %s36 = ssub.s32 128, 128
      %37 = vsyncadd [#allocation6], %s36
      %s39 = sshll.u32 [#allocation5], 4
      %s40 = int_to_ptr.vmem [resolvable:$true] %s39
      %42 = dma.hbm_to_vmem [thread:$0]  %s4, 128, %s40, [#allocation6]
    $region21: #{_net_forward_impl.1} parent=1 // pred_fallthru
      _
    // Predicated region
    $region22: #{_net_forward_impl.1} parent=1 // pred_check
      _
    $region23: #{_net_forward_impl.1} parent=1 // pred_check_branch
      %44 = sbr.rel (0) target = $region25
    $region24: #{_net_forward_impl.1} parent=1 // pred_region
      _
    $region25: #{_net_forward_impl.1} parent=1 // pred_fallthru
      _
    // Predicated region
    $region26: #{_net_forward_impl.1} parent=1 // pred_check
      _
    $region27: #{_net_forward_impl.1} parent=1 // pred_check_branch
      %46 = sbr.rel (0) target = $region29
    $region28: #{_net_forward_impl.1} parent=1 // pred_region
      _
    $region29: #{_net_forward_impl.1} parent=1 // pred_fallthru
      _
    // Predicated region
    $region30: #{_net_forward_impl.1} parent=1 // pred_check
      _
    $region31: #{_net_forward_impl.1} parent=1 // pred_check_branch
      %48 = sbr.rel (0) target = $region33
    $region32: #{_net_forward_impl.1} parent=1 // pred_region
      %49 = dma.done [#allocation3], 512
    $region33: #{_net_forward_impl.1} parent=1 // pred_fallthru
      _
    // Predicated region
    $region34: #{_net_forward_impl.1} parent=1 // pred_check
      _
    $region35: #{_net_forward_impl.1} parent=1 // pred_check_branch
      %51 = sbr.rel (0) target = $region37
    $region36: #{_net_forward_impl.1} parent=1 // pred_region
      %52 = dma.done [#allocation6], 128
    $region37: #{_net_forward_impl.1} parent=1 // pred_fallthru
      _
    %v53 = vld [vmem:[%s0] sm:$0xff]
    %v54 = vld [vmem:[#allocation2] sm:$0xff]
    %v55 = vld [vmem:[#allocation2 + $0x8] sm:$0xff]
    %v56 = vld [vmem:[#allocation2 + $0x10] sm:$0xff]
    %v57 = vld [vmem:[#allocation2 + $0x18] sm:$0xff]
    %v58 = vld [vmem:[%s2] sm:$0x1]
    %v59 = vld [vmem:[%s2 + $0x1] sm:$0x1]
    %v60 = vld [vmem:[%s2 + $0x2] sm:$0x1]
    %v61 = vlaneseq
    %v62 = vshrl.u32 %v61, 7
    %v63 = vsub.s32 0, %v62
    %v64 = vrot.slane %v58, %v63
    %vm65 = vcmask 261120
    %v67 = vsel %vm65, %v53, 0
    %69 = vmatprep.subr.mxu0 0.0
    %70 = vmatpush1.msra.mxu0 %v54
    %71 = vmatprep.subr.mxu0 0.0
    %72 = vmatpush1.msra.mxu0 %v55
    %73 = vmatprep.subr.mxu0 0.0
    %74 = vmatpush1.msra.mxu0 %v56
    %75 = vmatprep.subr.mxu0 0.0
    %76 = vmatpush1.msra.mxu0 %v57
    %77 = vmatprep.subr.mxu0 0.0
    %78 = vmatpush1.msra.mxu0 0.0
    %79 = vmatprep.subr.mxu0 0.0
    %80 = vmatpush1.msra.mxu0 0.0
    %81 = vmatprep.subr.mxu0 0.0
    %82 = vmatpush1.msra.mxu0 0.0
    %83 = vmatprep.subr.mxu0 0.0
    %84 = vmatpush1.msra.mxu0 0.0
    %85 = vmatprep.subr.mxu0 0.0
    %86 = vmatpush1.msra.mxu0 0.0
    %87 = vmatprep.subr.mxu0 0.0
    %88 = vmatpush1.msra.mxu0 0.0
    %89 = vmatprep.subr.mxu0 0.0
    %90 = vmatpush1.msra.mxu0 0.0
    %91 = vmatprep.subr.mxu0 0.0
    %92 = vmatpush1.msra.mxu0 0.0
    %93 = vmatprep.subr.mxu0 0.0
    %94 = vmatpush1.msra.mxu0 0.0
    %95 = vmatprep.subr.mxu0 0.0
    %96 = vmatpush1.msra.mxu0 0.0
    %97 = vmatprep.subr.mxu0 0.0
    %98 = vmatpush1.msra.mxu0 0.0
    %99 = vmatprep.subr.mxu0 0.0
    %100 = vmatpush1.msra.mxu0 0.0
    %101 = vmatprep.subr.mxu0 0.0
    %102 = vmatpush1.msra.mxu0 0.0
    %103 = vmatprep.subr.mxu0 0.0
    %104 = vmatpush1.msra.mxu0 0.0
    %105 = vmatprep.subr.mxu0 0.0
    %106 = vmatpush1.msra.mxu0 0.0
    %107 = vmatprep.subr.mxu0 0.0
    %108 = vmatpush1.msra.mxu0 0.0
    %109 = vmatprep.subr.mxu0 0.0
    %110 = vmatpush1.msra.mxu0 0.0
    %111 = vmatprep.subr.mxu0 0.0
    %112 = vmatpush1.msra.mxu0 0.0
    %113 = vmatprep.subr.mxu0 0.0
    %114 = vmatpush1.msra.mxu0 0.0
    %115 = vmatprep.subr.mxu0 0.0
    %116 = vmatpush1.msra.mxu0 0.0
    %117 = vmatprep.subr.mxu0 0.0
    %118 = vmatpush1.msra.mxu0 0.0
    %119 = vmatprep.subr.mxu0 0.0
    %120 = vmatpush1.msra.mxu0 0.0
    %121 = vmatprep.subr.mxu0 0.0
    %122 = vmatpush1.msra.mxu0 0.0
    %123 = vmatprep.subr.mxu0 0.0
    %124 = vmatpush1.msra.mxu0 0.0
    %125 = vmatprep.subr.mxu0 0.0
    %126 = vmatpush1.msra.mxu0 0.0
    %127 = vmatprep.subr.mxu0 0.0
    %128 = vmatpush1.msra.mxu0 0.0
    %129 = vmatprep.subr.mxu0 0.0
    %130 = vmatpush1.msra.mxu0 0.0
    %131 = vmatprep.subr.mxu0 0.0
    %132 = vmatpush1.msra.mxu0 0.0
    %133 = vmatprep.mubr.f32.mxu0 0.0
    %134 = vmatmul.mubr.f32.gmra.mrb[0].mxu0 %v67
    %v135 = vpop.f32.mrb[0].mxu0
    %v136 = vadd.f32 %v64, %v135
    %v137 = vpop.f32.mrb[0].mxu0
    %138 = vdwg.mxu0
    %139 = vadd.xlane.f32.xlu0 %v136
    %v140 = vpop.xlane.xlu0 %139
    %v141 = vmul.f32 %v140, 0.015625
    %v142 = vmul.f32 %v136, %v136
    %143 = vadd.xlane.f32.xlu0 %v142
    %v144 = vpop.xlane.xlu0 %143
    %v145 = vmul.f32 %v144, 0.015625
    %v146 = vmul.f32 %v141, %v141
    %v147 = vsub.f32 %v145, %v146
    %v148 = vmax.f32 %v147, 0.0
    %v149 = vsub.f32 %v136, %v141
    %v150 = vadd.f32 %v148, 1e-05
    %v151 = vrsqrt.pop %v150
    %v152 = vmul.f32 %v149, %v151
    %v153 = vlaneseq
    %v154 = vshrl.u32 %v153, 7
    %v155 = vsub.s32 0, %v154
    %v156 = vrot.slane %v59, %v155
    %v157 = vmul.f32 %v152, %v156
    %v158 = vlaneseq
    %v159 = vshrl.u32 %v158, 7
    %v160 = vsub.s32 0, %v159
    %v161 = vrot.slane %v60, %v160
    %v162 = vadd.f32 %v157, %v161
    %v163 = vand.u32 2147483647, %v162
    %v164 = vmul.f32 %v163, 0.70710677
    %v165 = vmul.f32 %v164, 0.3275911
    %v166 = vadd.f32 %v165, 1.0
    %v167 = vrcp.pop %v166
    %v168 = vmul.f32 %v167, 1.0614054
    %v169 = vadd.f32 %v168, -1.4531521
    %v170 = vmul.f32 %v169, %v167
    %v171 = vadd.f32 %v170, 1.4214138
    %v172 = vmul.f32 %v171, %v167
    %v173 = vadd.f32 %v172, -0.28449672
    %v174 = vmul.f32 %v173, %v167
    %v175 = vadd.f32 %v174, 0.2548296
    %v176 = vmul.f32 %v175, %v167
    %v177 = vmul.f32 %v162, 0.5
    %v178 = vmul.f32 %v177, %v176
    %v179 = vsub.f32 0.0, %v164
    %v180 = vmul.f32 %v179, %v164
    %v181 = vmul.f32 %v180, 1.442695
    %v182 = vpow.pop %v181
    %v183 = vmul.f32 %v178, %v182
    %vm184 = vcmp.ge.f32.partialorder %v162, 0.0
    %v185 = vsub.f32 %v162, %v183
    %v186 = vsel %vm184, %v185, %v183
    %v187 = vld [vmem:[%s3] sm:$0xff]
    %v188 = vld [vmem:[%s3 + $0x8] sm:$0xff]
    %v189 = vld [vmem:[%s3 + $0x10] sm:$0xff]
    %v190 = vld [vmem:[%s3 + $0x18] sm:$0xff]
    %v191 = vld [vmem:[%s3 + $0x20] sm:$0xff]
    %v192 = vld [vmem:[%s3 + $0x28] sm:$0xff]
    %v193 = vld [vmem:[%s3 + $0x30] sm:$0xff]
    %v194 = vld [vmem:[%s3 + $0x38] sm:$0xff]
    %v195 = vld [vmem:[%s3 + $0x40] sm:$0xff]
    %v196 = vld [vmem:[%s3 + $0x48] sm:$0xff]
    %v197 = vld [vmem:[%s3 + $0x50] sm:$0xff]
    %v198 = vld [vmem:[%s3 + $0x58] sm:$0xff]
    %v199 = vld [vmem:[%s3 + $0x60] sm:$0xff]
    %v200 = vld [vmem:[%s3 + $0x68] sm:$0xff]
    %v201 = vld [vmem:[%s3 + $0x70] sm:$0xff]
    %v202 = vld [vmem:[%s3 + $0x78] sm:$0xff]
    %v203 = vld [vmem:[#allocation5] sm:$0x1]
    %v204 = vld [vmem:[#allocation5 + $0x1] sm:$0x1]
    %v205 = vld [vmem:[#allocation5 + $0x2] sm:$0x1]
    %v206 = vlaneseq
    %v207 = vshrl.u32 %v206, 7
    %v208 = vsub.s32 0, %v207
    %v209 = vrot.slane %v203, %v208
    %210 = vmatprep.subr.mxu0 0.0
    %211 = vmatpush1.msra.mxu0 %v187
    %212 = vmatprep.subr.mxu0 0.0
    %213 = vmatpush1.msra.mxu0 %v188
    %214 = vmatprep.subr.mxu0 0.0
    %215 = vmatpush1.msra.mxu0 %v189
    %216 = vmatprep.subr.mxu0 0.0
    %217 = vmatpush1.msra.mxu0 %v190
    %218 = vmatprep.subr.mxu0 0.0
    %219 = vmatpush1.msra.mxu0 %v191
    %220 = vmatprep.subr.mxu0 0.0
    %221 = vmatpush1.msra.mxu0 %v192
    %222 = vmatprep.subr.mxu0 0.0
    %223 = vmatpush1.msra.mxu0 %v193
    %224 = vmatprep.subr.mxu0 0.0
    %225 = vmatpush1.msra.mxu0 %v194
    %226 = vmatprep.subr.mxu0 0.0
    %227 = vmatpush1.msra.mxu0 %v195
    %228 = vmatprep.subr.mxu0 0.0
    %229 = vmatpush1.msra.mxu0 %v196
    %230 = vmatprep.subr.mxu0 0.0
    %231 = vmatpush1.msra.mxu0 %v197
    %232 = vmatprep.subr.mxu0 0.0
    %233 = vmatpush1.msra.mxu0 %v198
    %234 = vmatprep.subr.mxu0 0.0
    %235 = vmatpush1.msra.mxu0 %v199
    %236 = vmatprep.subr.mxu0 0.0
    %237 = vmatpush1.msra.mxu0 %v200
    %238 = vmatprep.subr.mxu0 0.0
    %239 = vmatpush1.msra.mxu0 %v201
    %240 = vmatprep.subr.mxu0 0.0
    %241 = vmatpush1.msra.mxu0 %v202
    %242 = vmatprep.subr.mxu0 0.0
    %243 = vmatpush1.msra.mxu0 0.0
    %244 = vmatprep.subr.mxu0 0.0
    %245 = vmatpush1.msra.mxu0 0.0
    %246 = vmatprep.subr.mxu0 0.0
    %247 = vmatpush1.msra.mxu0 0.0
    %248 = vmatprep.subr.mxu0 0.0
    %249 = vmatpush1.msra.mxu0 0.0
    %250 = vmatprep.subr.mxu0 0.0
    %251 = vmatpush1.msra.mxu0 0.0
    %252 = vmatprep.subr.mxu0 0.0
    %253 = vmatpush1.msra.mxu0 0.0
    %254 = vmatprep.subr.mxu0 0.0
    %255 = vmatpush1.msra.mxu0 0.0
    %256 = vmatprep.subr.mxu0 0.0
    %257 = vmatpush1.msra.mxu0 0.0
    %258 = vmatprep.subr.mxu0 0.0
    %259 = vmatpush1.msra.mxu0 0.0
    %260 = vmatprep.subr.mxu0 0.0
    %261 = vmatpush1.msra.mxu0 0.0
    %262 = vmatprep.subr.mxu0 0.0
    %263 = vmatpush1.msra.mxu0 0.0
    %264 = vmatprep.subr.mxu0 0.0
    %265 = vmatpush1.msra.mxu0 0.0
    %266 = vmatprep.subr.mxu0 0.0
    %267 = vmatpush1.msra.mxu0 0.0
    %268 = vmatprep.subr.mxu0 0.0
    %269 = vmatpush1.msra.mxu0 0.0
    %270 = vmatprep.subr.mxu0 0.0
    %271 = vmatpush1.msra.mxu0 0.0
    %272 = vmatprep.subr.mxu0 0.0
    %273 = vmatpush1.msra.mxu0 0.0
    %274 = vmatprep.mubr.f32.mxu0 0.0
    %275 = vmatmul.mubr.f32.gmra.mrb[0].mxu0 %v186
    %v276 = vpop.f32.mrb[0].mxu0
    %v277 = vadd.f32 %v209, %v276
    %v278 = vpop.f32.mrb[0].mxu0
    %279 = vdwg.mxu0
    %280 = vadd.xlane.f32.xlu0 %v277
    %v281 = vpop.xlane.xlu0 %280
    %v282 = vmul.f32 %v281, 0.015625
    %v283 = vmul.f32 %v277, %v277
    %284 = vadd.xlane.f32.xlu0 %v283
    %v285 = vpop.xlane.xlu0 %284
    %v286 = vmul.f32 %v285, 0.015625
    %v287 = vmul.f32 %v282, %v282
    %v288 = vsub.f32 %v286, %v287
    %v289 = vmax.f32 %v288, 0.0
    %v290 = vsub.f32 %v277, %v282
    %v291 = vadd.f32 %v289, 1e-05
    %v292 = vrsqrt.pop %v291
    %v293 = vmul.f32 %v290, %v292
    %v294 = vlaneseq
    %v295 = vshrl.u32 %v294, 7
    %v296 = vsub.s32 0, %v295
    %v297 = vrot.slane %v204, %v296
    %v298 = vmul.f32 %v293, %v297
    %v299 = vlaneseq
    %v300 = vshrl.u32 %v299, 7
    %v301 = vsub.s32 0, %v300
    %v302 = vrot.slane %v205, %v301
    %v303 = vadd.f32 %v298, %v302
    %v304 = vand.u32 2147483647, %v303
    %v305 = vmul.f32 %v304, 0.70710677
    %v306 = vmul.f32 %v305, 0.3275911
    %v307 = vadd.f32 %v306, 1.0
    %v308 = vrcp.pop %v307
    %v309 = vmul.f32 %v308, 1.0614054
    %v310 = vadd.f32 %v309, -1.4531521
    %v311 = vmul.f32 %v310, %v308
    %v312 = vadd.f32 %v311, 1.4214138
    %v313 = vmul.f32 %v312, %v308
    %v314 = vadd.f32 %v313, -0.28449672
    %v315 = vmul.f32 %v314, %v308
    %v316 = vadd.f32 %v315, 0.2548296
    %v317 = vmul.f32 %v316, %v308
    %v318 = vmul.f32 %v303, 0.5
    %v319 = vmul.f32 %v318, %v317
    %v320 = vsub.f32 0.0, %v305
    %v321 = vmul.f32 %v320, %v305
    %v322 = vmul.f32 %v321, 1.442695
    %v323 = vpow.pop %v322
    %v324 = vmul.f32 %v319, %v323
    %vm325 = vcmp.ge.f32.partialorder %v303, 0.0
    %v326 = vsub.f32 %v303, %v324
    %v327 = vsel %vm325, %v326, %v324
    %v328 = vld [vmem:[%s5] sm:$0xff]
    %v329 = vld [vmem:[%s5 + $0x8] sm:$0xff]
    %v330 = vld [vmem:[%s5 + $0x10] sm:$0xff]
    %v331 = vld [vmem:[%s5 + $0x18] sm:$0xff]
    %v332 = vld [vmem:[%s5 + $0x20] sm:$0xff]
    %v333 = vld [vmem:[%s5 + $0x28] sm:$0xff]
    %v334 = vld [vmem:[%s5 + $0x30] sm:$0xff]
    %v335 = vld [vmem:[%s5 + $0x38] sm:$0xff]
    %v336 = vld [vmem:[%s5 + $0x40] sm:$0xff]
    %v337 = vld [vmem:[%s5 + $0x48] sm:$0xff]
    %v338 = vld [vmem:[%s5 + $0x50] sm:$0xff]
    %v339 = vld [vmem:[%s5 + $0x58] sm:$0xff]
    %v340 = vld [vmem:[%s5 + $0x60] sm:$0xff]
    %v341 = vld [vmem:[%s5 + $0x68] sm:$0xff]
    %v342 = vld [vmem:[%s5 + $0x70] sm:$0xff]
    %v343 = vld [vmem:[%s5 + $0x78] sm:$0xff]
    %v344 = vld [vmem:[%s6] sm:$0x1]
    %v346 = vlaneseq
    %v347 = vshrl.u32 %v346, 7
    %v348 = vsub.s32 0, %v347
    %v349 = vrot.slane %v344, %v348
    %351 = vmatprep.subr.mxu0 0.0
    %352 = vmatpush1.msra.mxu0 %v328
    %353 = vmatprep.subr.mxu0 0.0
    %354 = vmatpush1.msra.mxu0 %v329
    %355 = vmatprep.subr.mxu0 0.0
    %356 = vmatpush1.msra.mxu0 %v330
    %357 = vmatprep.subr.mxu0 0.0
    %358 = vmatpush1.msra.mxu0 %v331
    %359 = vmatprep.subr.mxu0 0.0
    %360 = vmatpush1.msra.mxu0 %v332
    %361 = vmatprep.subr.mxu0 0.0
    %362 = vmatpush1.msra.mxu0 %v333
    %363 = vmatprep.subr.mxu0 0.0
    %364 = vmatpush1.msra.mxu0 %v334
    %365 = vmatprep.subr.mxu0 0.0
    %366 = vmatpush1.msra.mxu0 %v335
    %367 = vmatprep.subr.mxu0 0.0
    %368 = vmatpush1.msra.mxu0 %v336
    %369 = vmatprep.subr.mxu0 0.0
    %370 = vmatpush1.msra.mxu0 %v337
    %371 = vmatprep.subr.mxu0 0.0
    %372 = vmatpush1.msra.mxu0 %v338
    %373 = vmatprep.subr.mxu0 0.0
    %374 = vmatpush1.msra.mxu0 %v339
    %375 = vmatprep.subr.mxu0 0.0
    %376 = vmatpush1.msra.mxu0 %v340
    %377 = vmatprep.subr.mxu0 0.0
    %378 = vmatpush1.msra.mxu0 %v341
    %379 = vmatprep.subr.mxu0 0.0
    %380 = vmatpush1.msra.mxu0 %v342
    %381 = vmatprep.subr.mxu0 0.0
    %382 = vmatpush1.msra.mxu0 %v343
    %383 = vmatprep.subr.mxu0 0.0
    %384 = vmatpush1.msra.mxu0 0.0
    %385 = vmatprep.subr.mxu0 0.0
    %386 = vmatpush1.msra.mxu0 0.0
    %387 = vmatprep.subr.mxu0 0.0
    %388 = vmatpush1.msra.mxu0 0.0
    %389 = vmatprep.subr.mxu0 0.0
    %390 = vmatpush1.msra.mxu0 0.0
    %391 = vmatprep.subr.mxu0 0.0
    %392 = vmatpush1.msra.mxu0 0.0
    %393 = vmatprep.subr.mxu0 0.0
    %394 = vmatpush1.msra.mxu0 0.0
    %395 = vmatprep.subr.mxu0 0.0
    %396 = vmatpush1.msra.mxu0 0.0
    %397 = vmatprep.subr.mxu0 0.0
    %398 = vmatpush1.msra.mxu0 0.0
    %399 = vmatprep.subr.mxu0 0.0
    %400 = vmatpush1.msra.mxu0 0.0
    %401 = vmatprep.subr.mxu0 0.0
    %402 = vmatpush1.msra.mxu0 0.0
    %403 = vmatprep.subr.mxu0 0.0
    %404 = vmatpush1.msra.mxu0 0.0
    %405 = vmatprep.subr.mxu0 0.0
    %406 = vmatpush1.msra.mxu0 0.0
    %407 = vmatprep.subr.mxu0 0.0
    %408 = vmatpush1.msra.mxu0 0.0
    %409 = vmatprep.subr.mxu0 0.0
    %410 = vmatpush1.msra.mxu0 0.0
    %411 = vmatprep.subr.mxu0 0.0
    %412 = vmatpush1.msra.mxu0 0.0
    %413 = vmatprep.subr.mxu0 0.0
    %414 = vmatpush1.msra.mxu0 0.0
    %415 = vmatprep.mubr.f32.mxu0 0.0
    %416 = vmatmul.mubr.f32.gmra.mrb[0].mxu0 %v327
    %v417 = vpop.f32.mrb[0].mxu0
    %v418 = vadd.f32 %v349, %v417
    %v419 = vpop.f32.mrb[0].mxu0
    %420 = vdwg.mxu0
    %vm421 = vcmask 130048
    %422 = vst.msk [vmem:[#allocation7] sm:$0xff] %vm421, %v418
    // Predicated region
    $region38: #{_net_forward_impl.1} parent=1 // pred_check
      _
    $region39: #{_net_forward_impl.1} parent=1 // pred_check_branch
      %424 = sbr.rel (0) target = $region41
    $region40: #{_net_forward_impl.1} parent=1 // pred_region
      %s426 = ssub.s32 128, 128
      %427 = vsyncadd [#allocation4], %s426
      %s429 = sshll.u32 [#allocation7], 4
      %s430 = int_to_ptr.vmem [resolvable:$true] %s429
      %432 = dma.vmem_to_hbm [thread:$0]  %s430, 128, %s7, [#allocation4]
    $region41: #{_net_forward_impl.1} parent=1 // pred_fallthru
      _
    // Predicated region
    $region42: #{_net_forward_impl.1} parent=1 // pred_check
      _
    $region43: #{_net_forward_impl.1} parent=1 // pred_check_branch
      %434 = sbr.rel (0) target = $region45
    $region44: #{_net_forward_impl.1} parent=1 // pred_region
      %435 = dma.done [#allocation4], 128
    $region45: #{_net_forward_impl.1} parent=1 // pred_fallthru
      _
    %436 = vsyncpa [#allocation3], 1
    %437 = vsyncpa [#allocation6], 1
    %438 = vsyncpa [#allocation4], 1

</llo_original>
